<compile_context>
chip_gen: v5e
topology: v5e:2x2
jax: 0.10.0
libtpu: 0.0.40
codegen_flags: <defaults>
</compile_context>

<pallas_src>
import numpy as np

import jax
import jax.numpy as jnp
from jax.experimental import pallas as pl
from jax.experimental.pallas import tpu as pltpu

HIDDEN = 50    # logical width: GCNConv(1, 50), GCNConv(50, 50), Linear(50, 1)
HPAD = 128     # lane-aligned padded width


def gnn_kernel(adj_ref, x_ref, dinv_ref, w1_ref, b1_ref, w2_ref, b2_ref,
               wc_ref, bc_ref, o_ref):
    adj = adj_ref[0]            # (N, N)  raw A + I (un-normalized)
    x = x_ref[0]                # (N, 1)  node features
    dinv = dinv_ref[0]          # (N, 1)  D^-1/2
    n = adj.shape[0]
    hp = o_ref.shape[-1]

    # ---- GCNConv layer 1: relu( D^-1/2 (A+I) D^-1/2 (X @ W1) + b1 ) ---------
    # X is (N, 1), W1 is (1, HPAD): X @ W1 is a broadcast multiply.
    xw1 = (x * w1_ref[...]) * dinv                                    # (N, HPAD)
    h1 = jnp.dot(adj, xw1, preferred_element_type=jnp.float32) * dinv
    h1 = jnp.maximum(h1 + b1_ref[...], 0.0)                           # (N, HPAD)

    # ---- GCNConv layer 2: relu( D^-1/2 (A+I) D^-1/2 (H1 @ W2) + b2 ) --------
    xw2 = jnp.dot(h1, w2_ref[...], preferred_element_type=jnp.float32) * dinv
    h2 = jnp.dot(adj, xw2, preferred_element_type=jnp.float32) * dinv
    h2 = jnp.maximum(h2 + b2_ref[...], 0.0)                           # (N, HPAD)

    # ---- fused global_mean_pool + Linear + sigmoid ---------------------------
    pooled = jnp.sum(h2, axis=0, keepdims=True) * (1.0 / n)           # (1, HPAD)
    logit = jnp.sum(pooled * wc_ref[...], axis=1, keepdims=True) + bc_ref[0]
    # lane-dense output slab; wrapper slices lane 0
    o_ref[0] = jax.nn.sigmoid(jnp.broadcast_to(logit, (1, hp)))


def gnn_forward(x, adj, dinv, params):
    """x: (B,N,1) f32 node features; adj: (B,N,N) f32 (A+I); dinv: (B,N,1) f32."""
    B, N, _ = x.shape
    w1, b1, w2, b2, wc, bc = params
    HP = w1.shape[1]

    flops = B * (2 * (2 * N * N * HP) + 2 * N * HP * HP)
    bytes_accessed = 4 * int(adj.size + x.size + dinv.size + w1.size + b1.size
                             + w2.size + b2.size + wc.size + bc.size + B * HP)

    grid_spec = pltpu.PrefetchScalarGridSpec(
        num_scalar_prefetch=0,
        grid=(B,),
        in_specs=[
            pl.BlockSpec((1, N, N), lambda b: (b, 0, 0)),        # A + I (per graph)
            pl.BlockSpec((1, N, 1), lambda b: (b, 0, 0)),        # x
            pl.BlockSpec((1, N, 1), lambda b: (b, 0, 0)),        # D^-1/2
            pl.BlockSpec((1, HP), lambda b: (0, 0)),             # W1 (row)
            pl.BlockSpec((1, HP), lambda b: (0, 0)),             # b1
            pl.BlockSpec((HP, HP), lambda b: (0, 0)),            # W2
            pl.BlockSpec((1, HP), lambda b: (0, 0)),             # b2
            pl.BlockSpec((1, HP), lambda b: (0, 0)),             # Wc (row)
            pl.BlockSpec(memory_space=pltpu.MemorySpace.SMEM),   # bc scalar
        ],
        out_specs=pl.BlockSpec((1, 1, HP), lambda b: (b, 0, 0)),
    )

    out = pl.pallas_call(
        gnn_kernel,
        out_shape=jax.ShapeDtypeStruct((B, 1, HP), jnp.float32),
        grid_spec=grid_spec,
        compiler_params=pltpu.CompilerParams(
            dimension_semantics=("parallel",)),
        cost_estimate=pl.CostEstimate(flops=flops, transcendentals=B,
                                      bytes_accessed=bytes_accessed),
    )(adj, x, dinv, w1, b1, w2, b2, wc, bc)
    return out[:, 0, :1]        # (B, 1) sigmoid outputs


def build_graph_arrays(edge_index, n):
    """Host-side (numpy, once — not per call) build of raw A+I and D^-1/2.
    NOTE: duplicate edges collapse to weight 1 (same as the original dense build)."""
    a = np.zeros((n, n), dtype=np.float32)
    a[np.asarray(edge_index[1]), np.asarray(edge_index[0])] = 1.0
    a += np.eye(n, dtype=np.float32)              # self loops
    deg = a.sum(axis=1)
    dinv = np.where(deg > 0, 1.0 / np.sqrt(deg), 0.0).astype(np.float32)
    return a, dinv


def init_params(key, hidden=HIDDEN, hpad=HPAD):
    k1, k2, k3 = jax.random.split(key, 3)
    w1 = jax.random.normal(k1, (1, hidden), jnp.float32)
    w2 = jax.random.normal(k2, (hidden, hidden), jnp.float32) / (hidden ** 0.5)
    wc = jax.random.normal(k3, (hidden,), jnp.float32) / (hidden ** 0.5)
    # zero-pad feature axes to HPAD so every kernel operand is lane-dense
    w1p = jnp.zeros((1, hpad), jnp.float32).at[:, :hidden].set(w1)
    w2p = jnp.zeros((hpad, hpad), jnp.float32).at[:hidden, :hidden].set(w2)
    wcp = jnp.zeros((1, hpad), jnp.float32).at[0, :hidden].set(wc)
    b1p = jnp.zeros((1, hpad), jnp.float32)
    b2p = jnp.zeros((1, hpad), jnp.float32)
    bc = jnp.zeros((1,), jnp.float32)
    return (w1p, b1p, w2p, b2p, wcp, bc)


if __name__ == "__main__":
    key = jax.random.PRNGKey(0)
    kx, kp = jax.random.split(key)

    N = 16      # nodes per graph
    B = 8       # graphs per pallas_call (amortize launch; feeds both v7x cores)
    # TODO(synk): variable node counts per graph would need a segment mean
    #             (per-graph counts), not the fixed 1/N used here.

    # ring graph, both directions -> (2, 32) edge_index
    src = np.arange(N, dtype=np.int64)
    dst = (src + 1) % N
    edge_index = np.concatenate(
        [np.stack([src, dst]), np.stack([dst, src])], axis=1)

    adj_np, dinv_np = build_graph_arrays(edge_index, N)
    adj = jnp.asarray(np.broadcast_to(adj_np, (B, N, N)))
    dinv = jnp.asarray(np.broadcast_to(dinv_np[:, None], (B, N, 1)))
    x = jax.random.normal(kx, (B, N, 1), jnp.float32)

    params = init_params(kp)

    out = gnn_forward(x, adj, dinv, params)          # (B, 1)
    out = jax.block_until_ready(out)

    # pure-JAX reference (dense normalized adjacency) for a loose sanity check
    w1, b1, w2, b2, wc, bc = params
    adj_norm = jnp.asarray(dinv_np[:, None] * adj_np * dinv_np[None, :])
    h1 = jax.nn.relu(jnp.einsum("nm,bmh->bnh", adj_norm, x * w1) + b1)
    h2 = jax.nn.relu(jnp.einsum("nm,bmh->bnh", adj_norm, h1 @ w2) + b2)
    pooled = h2.mean(axis=1)                          # (B, HPAD)
    ref = jax.nn.sigmoid(pooled @ wc[0] + bc[0])[:, None]

    assert out.shape == (B, 1)
    assert bool(jnp.all((out > 0.0) & (out < 1.0)))
    assert bool(jnp.allclose(out, ref, atol=2e-2, rtol=2e-2))

    print("KERNEL_OK")
</pallas_src>

<mosaic_0001>
module attributes {stable_mosaic.version = 11 : i64} {
  func.func @gnn_kernel(%arg0: i32, %arg1: memref<1x16x16xf32, #tpu.memory_space<vmem>>, %arg2: memref<1x16x1xf32, #tpu.memory_space<vmem>>, %arg3: memref<1x16x1xf32, #tpu.memory_space<vmem>>, %arg4: memref<1x128xf32, #tpu.memory_space<vmem>>, %arg5: memref<1x128xf32, #tpu.memory_space<vmem>>, %arg6: memref<128x128xf32, #tpu.memory_space<vmem>>, %arg7: memref<1x128xf32, #tpu.memory_space<vmem>>, %arg8: memref<1x128xf32, #tpu.memory_space<vmem>>, %arg9: memref<1xf32, #tpu.memory_space<smem>>, %arg10: memref<1x1x128xf32, #tpu.memory_space<vmem>>) attributes {dimension_semantics = [#tpu.dimension_semantics<parallel>], iteration_bounds = array<i64: 8>, scalar_prefetch = 0 : i64, scratch_operands = 0 : i64, tpu.core_type = #tpu.core_type<tc>, window_params = [{transform_indices = @transform_0, window_bounds = array<i64: 1, 16, 16>}, {transform_indices = @transform_1, window_bounds = array<i64: 1, 16, 1>}, {transform_indices = @transform_2, window_bounds = array<i64: 1, 16, 1>}, {pipeline_mode = #tpu.pipeline_mode<synchronous>, transform_indices = @transform_3, window_bounds = array<i64: 1, 128>}, {pipeline_mode = #tpu.pipeline_mode<synchronous>, transform_indices = @transform_4, window_bounds = array<i64: 1, 128>}, {pipeline_mode = #tpu.pipeline_mode<synchronous>, transform_indices = @transform_5, window_bounds = array<i64: 128, 128>}, {pipeline_mode = #tpu.pipeline_mode<synchronous>, transform_indices = @transform_6, window_bounds = array<i64: 1, 128>}, {pipeline_mode = #tpu.pipeline_mode<synchronous>, transform_indices = @transform_7, window_bounds = array<i64: 1, 128>}, {transform_indices = @transform_8, window_bounds = array<i64: 1>}, {transform_indices = @transform_9, window_bounds = array<i64: 1, 1, 128>}]} {
    %c0 = arith.constant 0 : index
    %c0_0 = arith.constant 0 : index
    %c0_1 = arith.constant 0 : index
    %0 = vector.load %arg1[%c0, %c0_0, %c0_1] : memref<1x16x16xf32, #tpu.memory_space<vmem>>, vector<1x16x16xf32>
    %1 = vector.shape_cast %0 : vector<1x16x16xf32> to vector<16x16xf32>
    %c0_2 = arith.constant 0 : index
    %c0_3 = arith.constant 0 : index
    %c0_4 = arith.constant 0 : index
    %2 = vector.load %arg2[%c0_2, %c0_3, %c0_4] : memref<1x16x1xf32, #tpu.memory_space<vmem>>, vector<1x16x1xf32>
    %3 = vector.shape_cast %2 : vector<1x16x1xf32> to vector<16x1xf32>
    %c0_5 = arith.constant 0 : index
    %c0_6 = arith.constant 0 : index
    %c0_7 = arith.constant 0 : index
    %4 = vector.load %arg3[%c0_5, %c0_6, %c0_7] : memref<1x16x1xf32, #tpu.memory_space<vmem>>, vector<1x16x1xf32>
    %5 = vector.shape_cast %4 : vector<1x16x1xf32> to vector<16x1xf32>
    %c0_8 = arith.constant 0 : index
    %c0_9 = arith.constant 0 : index
    %6 = vector.load %arg4[%c0_8, %c0_9] : memref<1x128xf32, #tpu.memory_space<vmem>>, vector<1x128xf32>
    %7 = vector.broadcast %3 : vector<16x1xf32> to vector<16x128xf32>
    %8 = vector.broadcast %6 : vector<1x128xf32> to vector<16x128xf32>
    %9 = arith.mulf %7, %8 : vector<16x128xf32>
    %10 = vector.broadcast %5 : vector<16x1xf32> to vector<16x128xf32>
    %11 = arith.mulf %9, %10 : vector<16x128xf32>
    %cst = arith.constant dense<0.000000e+00> : vector<16x128xf32>
    %12 = tpu.matmul %1, %11, %cst {dimension_numbers = #tpu.dot_dimension_numbers<[1], [0], [0], [1], [0, 0, 1, 1], [], []>} : vector<16x16xf32>, vector<16x128xf32>, vector<16x128xf32> -> vector<16x128xf32>
    %13 = vector.broadcast %5 : vector<16x1xf32> to vector<16x128xf32>
    %14 = arith.mulf %12, %13 : vector<16x128xf32>
    %c0_10 = arith.constant 0 : index
    %c0_11 = arith.constant 0 : index
    %15 = vector.load %arg5[%c0_10, %c0_11] : memref<1x128xf32, #tpu.memory_space<vmem>>, vector<1x128xf32>
    %16 = vector.broadcast %15 : vector<1x128xf32> to vector<16x128xf32>
    %17 = arith.addf %14, %16 : vector<16x128xf32>
    %cst_12 = arith.constant 0.000000e+00 : f32
    %18 = vector.broadcast %cst_12 : f32 to vector<16x128xf32>
    %19 = arith.maximumf %17, %18 : vector<16x128xf32>
    %c0_13 = arith.constant 0 : index
    %c0_14 = arith.constant 0 : index
    %20 = vector.load %arg6[%c0_13, %c0_14] : memref<128x128xf32, #tpu.memory_space<vmem>>, vector<128x128xf32>
    %cst_15 = arith.constant dense<0.000000e+00> : vector<16x128xf32>
    %21 = tpu.matmul %19, %20, %cst_15 {dimension_numbers = #tpu.dot_dimension_numbers<[1], [0], [0], [1], [0, 0, 1, 1], [], []>} : vector<16x128xf32>, vector<128x128xf32>, vector<16x128xf32> -> vector<16x128xf32>
    %22 = vector.broadcast %5 : vector<16x1xf32> to vector<16x128xf32>
    %23 = arith.mulf %21, %22 : vector<16x128xf32>
    %cst_16 = arith.constant dense<0.000000e+00> : vector<16x128xf32>
    %24 = tpu.matmul %1, %23, %cst_16 {dimension_numbers = #tpu.dot_dimension_numbers<[1], [0], [0], [1], [0, 0, 1, 1], [], []>} : vector<16x16xf32>, vector<16x128xf32>, vector<16x128xf32> -> vector<16x128xf32>
    %25 = vector.broadcast %5 : vector<16x1xf32> to vector<16x128xf32>
    %26 = arith.mulf %24, %25 : vector<16x128xf32>
    %c0_17 = arith.constant 0 : index
    %c0_18 = arith.constant 0 : index
    %27 = vector.load %arg7[%c0_17, %c0_18] : memref<1x128xf32, #tpu.memory_space<vmem>>, vector<1x128xf32>
    %28 = vector.broadcast %27 : vector<1x128xf32> to vector<16x128xf32>
    %29 = arith.addf %26, %28 : vector<16x128xf32>
    %cst_19 = arith.constant 0.000000e+00 : f32
    %30 = vector.broadcast %cst_19 : f32 to vector<16x128xf32>
    %31 = arith.maximumf %29, %30 : vector<16x128xf32>
    %cst_20 = arith.constant dense<0.000000e+00> : vector<128xf32>
    %32 = vector.multi_reduction <add>, %31, %cst_20 [0] : vector<16x128xf32> to vector<128xf32>
    %33 = vector.shape_cast %32 : vector<128xf32> to vector<1x128xf32>
    %cst_21 = arith.constant 6.250000e-02 : f32
    %34 = vector.broadcast %cst_21 : f32 to vector<1x128xf32>
    %35 = arith.mulf %33, %34 : vector<1x128xf32>
    %c0_22 = arith.constant 0 : index
    %c0_23 = arith.constant 0 : index
    %36 = vector.load %arg8[%c0_22, %c0_23] : memref<1x128xf32, #tpu.memory_space<vmem>>, vector<1x128xf32>
    %37 = arith.mulf %35, %36 : vector<1x128xf32>
    %cst_24 = arith.constant dense<0.000000e+00> : vector<1xf32>
    %38 = vector.multi_reduction <add>, %37, %cst_24 [1] : vector<1x128xf32> to vector<1xf32>
    %39 = vector.shape_cast %38 : vector<1xf32> to vector<1x1xf32>
    %c0_25 = arith.constant 0 : index
    %40 = memref.load %arg9[%c0_25] : memref<1xf32, #tpu.memory_space<smem>>
    %41 = vector.broadcast %40 : f32 to vector<1x1xf32>
    %42 = arith.addf %39, %41 : vector<1x1xf32>
    %43 = vector.shape_cast %42 : vector<1x1xf32> to vector<1x1xf32>
    %44 = vector.broadcast %43 : vector<1x1xf32> to vector<1x128xf32>
    %45 = arith.negf %44 : vector<1x128xf32>
    %46 = math.exp %45 : vector<1x128xf32>
    %cst_26 = arith.constant 1.000000e+00 : f32
    %47 = vector.broadcast %cst_26 : f32 to vector<1x128xf32>
    %48 = arith.addf %47, %46 : vector<1x128xf32>
    %49 = arith.divf %47, %48 : vector<1x128xf32>
    %c0_27 = arith.constant 0 : index
    %c0_28 = arith.constant 0 : index
    %c0_29 = arith.constant 0 : index
    %50 = vector.load %arg10[%c0_27, %c0_28, %c0_29] : memref<1x1x128xf32, #tpu.memory_space<vmem>>, vector<1x1x128xf32>
    %51 = vector.shape_cast %50 : vector<1x1x128xf32> to vector<1x128xf32>
    %52 = vector.shape_cast %49 : vector<1x128xf32> to vector<1x1x128xf32>
    tpu.vector_store %arg10[%c0_27, %c0_28, %c0_29], %52 {strides = array<i32>} : memref<1x1x128xf32, #tpu.memory_space<vmem>>, vector<1x1x128xf32>,
    return
  }
  func.func @transform_0(%arg0: i32) -> (i32, i32, i32) {
    %c0_i32 = arith.constant 0 : i32
    %c0_i32_0 = arith.constant 0 : i32
    %c0_i32_1 = arith.constant 0 : i32
    return %arg0, %c0_i32, %c0_i32_0 : i32, i32, i32
  }
  func.func @transform_1(%arg0: i32) -> (i32, i32, i32) {
    %c0_i32 = arith.constant 0 : i32
    %c0_i32_0 = arith.constant 0 : i32
    %c0_i32_1 = arith.constant 0 : i32
    return %arg0, %c0_i32, %c0_i32_0 : i32, i32, i32
  }
  func.func @transform_2(%arg0: i32) -> (i32, i32, i32) {
    %c0_i32 = arith.constant 0 : i32
    %c0_i32_0 = arith.constant 0 : i32
    %c0_i32_1 = arith.constant 0 : i32
    return %arg0, %c0_i32, %c0_i32_0 : i32, i32, i32
  }
  func.func @transform_3(%arg0: i32) -> (i32, i32) {
    %c0_i32 = arith.constant 0 : i32
    %c0_i32_0 = arith.constant 0 : i32
    %c0_i32_1 = arith.constant 0 : i32
    return %c0_i32, %c0_i32_0 : i32, i32
  }
  func.func @transform_4(%arg0: i32) -> (i32, i32) {
    %c0_i32 = arith.constant 0 : i32
    %c0_i32_0 = arith.constant 0 : i32
    %c0_i32_1 = arith.constant 0 : i32
    return %c0_i32, %c0_i32_0 : i32, i32
  }
  func.func @transform_5(%arg0: i32) -> (i32, i32) {
    %c0_i32 = arith.constant 0 : i32
    %c0_i32_0 = arith.constant 0 : i32
    %c0_i32_1 = arith.constant 0 : i32
    return %c0_i32, %c0_i32_0 : i32, i32
  }
  func.func @transform_6(%arg0: i32) -> (i32, i32) {
    %c0_i32 = arith.constant 0 : i32
    %c0_i32_0 = arith.constant 0 : i32
    %c0_i32_1 = arith.constant 0 : i32
    return %c0_i32, %c0_i32_0 : i32, i32
  }
  func.func @transform_7(%arg0: i32) -> (i32, i32) {
    %c0_i32 = arith.constant 0 : i32
    %c0_i32_0 = arith.constant 0 : i32
    %c0_i32_1 = arith.constant 0 : i32
    return %c0_i32, %c0_i32_0 : i32, i32
  }
  func.func @transform_8(%arg0: i32) -> i32 {
    %c0_i32 = arith.constant 0 : i32
    %c0_i32_0 = arith.constant 0 : i32
    return %c0_i32 : i32
  }
  func.func @transform_9(%arg0: i32) -> (i32, i32, i32) {
    %c0_i32 = arith.constant 0 : i32
    %c0_i32_0 = arith.constant 0 : i32
    %c0_i32_1 = arith.constant 0 : i32
    return %arg0, %c0_i32, %c0_i32_0 : i32, i32, i32
  }
}

</mosaic_0001>

<llo_original>
// kernel: tpu_custom_call.1
$region0: #{tpu_custom_call.1}
  #allocation0 [shape = 'u32[]', space=smem, size = 0x4, offset = 0x4, fixed_abs, tag = 'smem constant byte address 0x4 - core index']
  #allocation1 [shape = 'u32[72,128]{1,0:T(1,128)}', space=vmem, size = 0x9000, scoped, tag = 'internal scratch']
  #allocation2 [shape = 'f32[1]{0:T(128)S(6)}', space=smem, size = 0x200, scoped, tag = 'scoped memory for tpu_custom_call.1']
  %s0 = inlined_call_operand.vmem [shape: f32[8,16,16], index: 0, kind: input, shape index: {}]
  %s1 = inlined_call_operand.vmem [shape: f32[8,16,1], index: 1, kind: input, shape index: {}]
  %s2 = inlined_call_operand.vmem [shape: f32[8,16,1], index: 2, kind: input, shape index: {}]
  %s3 = inlined_call_operand.vmem [shape: f32[1,128], index: 3, kind: input, shape index: {}]
  %s4 = inlined_call_operand.vmem [shape: f32[1,128], index: 4, kind: input, shape index: {}]
  %s5 = inlined_call_operand.vmem [shape: f32[128,128], index: 5, kind: input, shape index: {}]
  %s6 = inlined_call_operand.vmem [shape: f32[1,128], index: 6, kind: input, shape index: {}]
  %s7 = inlined_call_operand.vmem [shape: f32[1,128], index: 7, kind: input, shape index: {}]
  %s8 = inlined_call_operand.<no memory space> [shape: f32[1], index: 8, kind: input, shape index: {}]
  %s9 = inlined_call_operand.hbm [shape: f32[8,1,128], index: 9, kind: output, shape index: {}]
  %s10 = sld [smem:[#allocation0]]
  $region69: #{tpu_custom_call.1} parent=0
    _
  %s12 = ssub.s32 1, %s10
  %s13 = scalar_select 0, %s12, %s10
  %14 = sst [smem:[#allocation2]] %s8
  $region1: #{tpu_custom_call.1} parent=0
    #allocation3 [shape = 'u8[1024]{0}', space=vmem, size = 0x400, scoped, tag = 'output window, operand 0']
    #allocation4 [shape = 's32[2]{0}', space=sflag, size = 0x8, scoped, tag = 'scoped memory for tpu_custom_call.1']
    %15 = vsyncpa [#allocation4], 0
    %s16 = scalar_lea.sflag [#allocation4], 1
    %17 = vsyncpa %s16, 0
    loop: start=0, step=1, limit=10
    $region2: #{tpu_custom_call.1} parent=1 // loop_pre_header
      _
    $region3: #{tpu_custom_call.1} parent=1 // loop_header
      %s19 = sphi 0, %s23
      %p20 = scmp.ge.s32.totalorder %s19, 10
      %s29 = sphi 0, %s31
      %s32 = sphi 0, %s29
      %s33 = sphi 0, %s32
      %s49 = sphi 0, %s33
      %s55 = sphi 0, %s57
      %s58 = sphi 0, %s55
      %s59 = sphi 0, %s58
      %s75 = sphi 0, %s59
      %s81 = sphi 0, %s83
      %s84 = sphi 0, %s81
      %s85 = sphi 0, %s84
      %s101 = sphi 0, %s85
      %s105 = sphi 0, %s105
      %s107 = sphi 0, %s105
      %s108 = sphi 0, %s107
      %s122 = sphi 0, %s108
      %s126 = sphi 0, %s126
      %s128 = sphi 0, %s126
      %s129 = sphi 0, %s128
      %s143 = sphi 0, %s129
      %s147 = sphi 0, %s147
      %s149 = sphi 0, %s147
      %s150 = sphi 0, %s149
      %s164 = sphi 0, %s150
      %s168 = sphi 0, %s168
      %s170 = sphi 0, %s168
      %s171 = sphi 0, %s170
      %s185 = sphi 0, %s171
      %s189 = sphi 0, %s189
      %s191 = sphi 0, %s189
      %s192 = sphi 0, %s191
      %s206 = sphi 0, %s192
      %s210 = sphi 0, %s210
      %s212 = sphi 0, %s210
      %s213 = sphi 0, %s212
      %s227 = sphi 0, %s213
      %s233 = sphi 0, %s235
      %s236 = sphi 0, %s233
      %s237 = sphi 0, %s236
      %s253 = sphi 0, %s237
    $region4: #{tpu_custom_call.1} parent=1 // loop_header_branch
      %22 = sbr.rel (%p20) target = $region8
    $region5: #{tpu_custom_call.1} parent=1 // loop_body
      %s24 = ssub.s32 %s19, 1
      %s25 = ssub.s32 %s19, 2
      %s26 = sadd.s32 %s19, 1
      %s27 = ssub.s32 %s19, %s26
      %p28 = scmp.eq.s32.totalorder %s27, 0
      %s30 = sadd.s32 %s29, 1
      %s31 = scalar_select %p28, %s29, %s30
      %p34 = pneg %p28
      %p35 = scmp.eq.s32.totalorder %s19, 7
      %p36 = por %p34, %p35
      %p37 = scmp.ne.s32.totalorder %s29, %s32
      %p38 = scmp.eq.s32.totalorder %s19, 0
      %p39 = por %p37, %p38
      %p40 = scmp.ne.s32.totalorder %s29, %s32
      %p41 = scmp.eq.s32.totalorder %s24, 7
      %p42 = por %p40, %p41
      %p43 = scmp.ne.s32.totalorder %s32, %s33
      %p44 = scmp.eq.s32.totalorder %s24, 0
      %p45 = por %p43, %p44
      %p46 = scmp.ne.s32.totalorder %s32, %s33
      %p47 = scmp.eq.s32.totalorder %s25, 7
      %p48 = por %p46, %p47
      %p50 = scmp.ne.s32.totalorder %s33, %s49
      %p51 = scmp.eq.s32.totalorder %s25, 0
      %p52 = por %p50, %p51
      %s53 = ssub.s32 %s19, %s26
      %p54 = scmp.eq.s32.totalorder %s53, 0
      %s56 = sadd.s32 %s55, 1
      %s57 = scalar_select %p54, %s55, %s56
      %p60 = pneg %p54
      %p61 = scmp.eq.s32.totalorder %s19, 7
      %p62 = por %p60, %p61
      %p63 = scmp.ne.s32.totalorder %s55, %s58
      %p64 = scmp.eq.s32.totalorder %s19, 0
      %p65 = por %p63, %p64
      %p66 = scmp.ne.s32.totalorder %s55, %s58
      %p67 = scmp.eq.s32.totalorder %s24, 7
      %p68 = por %p66, %p67
      %p69 = scmp.ne.s32.totalorder %s58, %s59
      %p70 = scmp.eq.s32.totalorder %s24, 0
      %p71 = por %p69, %p70
      %p72 = scmp.ne.s32.totalorder %s58, %s59
      %p73 = scmp.eq.s32.totalorder %s25, 7
      %p74 = por %p72, %p73
      %p76 = scmp.ne.s32.totalorder %s59, %s75
      %p77 = scmp.eq.s32.totalorder %s25, 0
      %p78 = por %p76, %p77
      %s79 = ssub.s32 %s19, %s26
      %p80 = scmp.eq.s32.totalorder %s79, 0
      %s82 = sadd.s32 %s81, 1
      %s83 = scalar_select %p80, %s81, %s82
      %p86 = pneg %p80
      %p87 = scmp.eq.s32.totalorder %s19, 7
      %p88 = por %p86, %p87
      %p89 = scmp.ne.s32.totalorder %s81, %s84
      %p90 = scmp.eq.s32.totalorder %s19, 0
      %p91 = por %p89, %p90
      %p92 = scmp.ne.s32.totalorder %s81, %s84
      %p93 = scmp.eq.s32.totalorder %s24, 7
      %p94 = por %p92, %p93
      %p95 = scmp.ne.s32.totalorder %s84, %s85
      %p96 = scmp.eq.s32.totalorder %s24, 0
      %p97 = por %p95, %p96
      %p98 = scmp.ne.s32.totalorder %s84, %s85
      %p99 = scmp.eq.s32.totalorder %s25, 7
      %p100 = por %p98, %p99
      %p102 = scmp.ne.s32.totalorder %s85, %s101
      %p103 = scmp.eq.s32.totalorder %s25, 0
      %p104 = por %p102, %p103
      %s106 = sadd.s32 %s105, 1
      %p109 = scmp.eq.s32.totalorder %s19, 7
      %p110 = scmp.ne.s32.totalorder %s105, %s107
      %p111 = scmp.eq.s32.totalorder %s19, 0
      %p112 = por %p110, %p111
      %p113 = scmp.ne.s32.totalorder %s105, %s107
      %p114 = scmp.eq.s32.totalorder %s24, 7
      %p115 = por %p113, %p114
      %p116 = scmp.ne.s32.totalorder %s107, %s108
      %p117 = scmp.eq.s32.totalorder %s24, 0
      %p118 = por %p116, %p117
      %p119 = scmp.ne.s32.totalorder %s107, %s108
      %p120 = scmp.eq.s32.totalorder %s25, 7
      %p121 = por %p119, %p120
      %p123 = scmp.ne.s32.totalorder %s108, %s122
      %p124 = scmp.eq.s32.totalorder %s25, 0
      %p125 = por %p123, %p124
      %s127 = sadd.s32 %s126, 1
      %p130 = scmp.eq.s32.totalorder %s19, 7
      %p131 = scmp.ne.s32.totalorder %s126, %s128
      %p132 = scmp.eq.s32.totalorder %s19, 0
      %p133 = por %p131, %p132
      %p134 = scmp.ne.s32.totalorder %s126, %s128
      %p135 = scmp.eq.s32.totalorder %s24, 7
      %p136 = por %p134, %p135
      %p137 = scmp.ne.s32.totalorder %s128, %s129
      %p138 = scmp.eq.s32.totalorder %s24, 0
      %p139 = por %p137, %p138
      %p140 = scmp.ne.s32.totalorder %s128, %s129
      %p141 = scmp.eq.s32.totalorder %s25, 7
      %p142 = por %p140, %p141
      %p144 = scmp.ne.s32.totalorder %s129, %s143
      %p145 = scmp.eq.s32.totalorder %s25, 0
      %p146 = por %p144, %p145
      %s148 = sadd.s32 %s147, 1
      %p151 = scmp.eq.s32.totalorder %s19, 7
      %p152 = scmp.ne.s32.totalorder %s147, %s149
      %p153 = scmp.eq.s32.totalorder %s19, 0
      %p154 = por %p152, %p153
      %p155 = scmp.ne.s32.totalorder %s147, %s149
      %p156 = scmp.eq.s32.totalorder %s24, 7
      %p157 = por %p155, %p156
      %p158 = scmp.ne.s32.totalorder %s149, %s150
      %p159 = scmp.eq.s32.totalorder %s24, 0
      %p160 = por %p158, %p159
      %p161 = scmp.ne.s32.totalorder %s149, %s150
      %p162 = scmp.eq.s32.totalorder %s25, 7
      %p163 = por %p161, %p162
      %p165 = scmp.ne.s32.totalorder %s150, %s164
      %p166 = scmp.eq.s32.totalorder %s25, 0
      %p167 = por %p165, %p166
      %s169 = sadd.s32 %s168, 1
      %p172 = scmp.eq.s32.totalorder %s19, 7
      %p173 = scmp.ne.s32.totalorder %s168, %s170
      %p174 = scmp.eq.s32.totalorder %s19, 0
      %p175 = por %p173, %p174
      %p176 = scmp.ne.s32.totalorder %s168, %s170
      %p177 = scmp.eq.s32.totalorder %s24, 7
      %p178 = por %p176, %p177
      %p179 = scmp.ne.s32.totalorder %s170, %s171
      %p180 = scmp.eq.s32.totalorder %s24, 0
      %p181 = por %p179, %p180
      %p182 = scmp.ne.s32.totalorder %s170, %s171
      %p183 = scmp.eq.s32.totalorder %s25, 7
      %p184 = por %p182, %p183
      %p186 = scmp.ne.s32.totalorder %s171, %s185
      %p187 = scmp.eq.s32.totalorder %s25, 0
      %p188 = por %p186, %p187
      %s190 = sadd.s32 %s189, 1
      %p193 = scmp.eq.s32.totalorder %s19, 7
      %p194 = scmp.ne.s32.totalorder %s189, %s191
      %p195 = scmp.eq.s32.totalorder %s19, 0
      %p196 = por %p194, %p195
      %p197 = scmp.ne.s32.totalorder %s189, %s191
      %p198 = scmp.eq.s32.totalorder %s24, 7
      %p199 = por %p197, %p198
      %p200 = scmp.ne.s32.totalorder %s191, %s192
      %p201 = scmp.eq.s32.totalorder %s24, 0
      %p202 = por %p200, %p201
      %p203 = scmp.ne.s32.totalorder %s191, %s192
      %p204 = scmp.eq.s32.totalorder %s25, 7
      %p205 = por %p203, %p204
      %p207 = scmp.ne.s32.totalorder %s192, %s206
      %p208 = scmp.eq.s32.totalorder %s25, 0
      %p209 = por %p207, %p208
      %s211 = sadd.s32 %s210, 1
      %p214 = scmp.eq.s32.totalorder %s19, 7
      %p215 = scmp.ne.s32.totalorder %s210, %s212
      %p216 = scmp.eq.s32.totalorder %s19, 0
      %p217 = por %p215, %p216
      %p218 = scmp.ne.s32.totalorder %s210, %s212
      %p219 = scmp.eq.s32.totalorder %s24, 7
      %p220 = por %p218, %p219
      %p221 = scmp.ne.s32.totalorder %s212, %s213
      %p222 = scmp.eq.s32.totalorder %s24, 0
      %p223 = por %p221, %p222
      %p224 = scmp.ne.s32.totalorder %s212, %s213
      %p225 = scmp.eq.s32.totalorder %s25, 7
      %p226 = por %p224, %p225
      %p228 = scmp.ne.s32.totalorder %s213, %s227
      %p229 = scmp.eq.s32.totalorder %s25, 0
      %p230 = por %p228, %p229
      %s231 = ssub.s32 %s19, %s26
      %p232 = scmp.eq.s32.totalorder %s231, 0
      %s234 = sadd.s32 %s233, 1
      %s235 = scalar_select %p232, %s233, %s234
      %p238 = pneg %p232
      %p239 = scmp.eq.s32.totalorder %s19, 7
      %p240 = por %p238, %p239
      %p241 = scmp.ne.s32.totalorder %s233, %s236
      %p242 = scmp.eq.s32.totalorder %s19, 0
      %p243 = por %p241, %p242
      %p244 = scmp.ne.s32.totalorder %s233, %s236
      %p245 = scmp.eq.s32.totalorder %s24, 7
      %p246 = por %p244, %p245
      %p247 = scmp.ne.s32.totalorder %s236, %s237
      %p248 = scmp.eq.s32.totalorder %s24, 0
      %p249 = por %p247, %p248
      %p250 = scmp.ne.s32.totalorder %s236, %s237
      %p251 = scmp.eq.s32.totalorder %s25, 7
      %p252 = por %p250, %p251
      %p254 = scmp.ne.s32.totalorder %s237, %s253
      %p255 = scmp.eq.s32.totalorder %s25, 0
      %p256 = por %p254, %p255
      %p257 = scmp.le.s32.totalorder 1, %s19
      %p258 = scmp.lt.s32.totalorder %s19, 9
      %p259 = pnand %p257, %p258
      %p260 = pneg %p259
      // Predicated region
      $region9: #{tpu_custom_call.1} parent=5 // pred_check
        _
      $region10: #{tpu_custom_call.1} parent=5 // pred_check_branch
        %262 = sbr.rel (%p259) target = $region12
      $region11: #{tpu_custom_call.1} parent=5 // pred_region
        %s263 = ssub.s32 %s19, 1
        // Predicated region
        $region13: #{tpu_custom_call.1} parent=11 // pred_check
          %p264 = pneg %p118
        $region14: #{tpu_custom_call.1} parent=11 // pred_check_branch
          %266 = sbr.rel (%p264) target = $region16
        $region15: #{tpu_custom_call.1} parent=11 // pred_region
          _
        $region16: #{tpu_custom_call.1} parent=11 // pred_fallthru
          _
        // Predicated region
        $region17: #{tpu_custom_call.1} parent=11 // pred_check
          %p267 = pneg %p139
        $region18: #{tpu_custom_call.1} parent=11 // pred_check_branch
          %269 = sbr.rel (%p267) target = $region20
        $region19: #{tpu_custom_call.1} parent=11 // pred_region
          _
        $region20: #{tpu_custom_call.1} parent=11 // pred_fallthru
          _
        // Predicated region
        $region21: #{tpu_custom_call.1} parent=11 // pred_check
          %p270 = pneg %p160
        $region22: #{tpu_custom_call.1} parent=11 // pred_check_branch
          %272 = sbr.rel (%p270) target = $region24
        $region23: #{tpu_custom_call.1} parent=11 // pred_region
          _
        $region24: #{tpu_custom_call.1} parent=11 // pred_fallthru
          _
        // Predicated region
        $region25: #{tpu_custom_call.1} parent=11 // pred_check
          %p273 = pneg %p181
        $region26: #{tpu_custom_call.1} parent=11 // pred_check_branch
          %275 = sbr.rel (%p273) target = $region28
        $region27: #{tpu_custom_call.1} parent=11 // pred_region
          _
        $region28: #{tpu_custom_call.1} parent=11 // pred_fallthru
          _
        // Predicated region
        $region29: #{tpu_custom_call.1} parent=11 // pred_check
          %p276 = pneg %p202
        $region30: #{tpu_custom_call.1} parent=11 // pred_check_branch
          %278 = sbr.rel (%p276) target = $region32
        $region31: #{tpu_custom_call.1} parent=11 // pred_region
          _
        $region32: #{tpu_custom_call.1} parent=11 // pred_fallthru
          _
        // Predicated region
        $region33: #{tpu_custom_call.1} parent=11 // pred_check
          %p279 = pneg %p223
        $region34: #{tpu_custom_call.1} parent=11 // pred_check_branch
          %281 = sbr.rel (%p279) target = $region36
        $region35: #{tpu_custom_call.1} parent=11 // pred_region
          _
        $region36: #{tpu_custom_call.1} parent=11 // pred_fallthru
          _
      $region12: #{tpu_custom_call.1} parent=5 // pred_fallthru
        _
      %p282 = scmp.lt.s32.totalorder %s19, 8
      // Predicated region
      $region37: #{tpu_custom_call.1} parent=5 // pred_check
        %p283 = pneg %p282
      $region38: #{tpu_custom_call.1} parent=5 // pred_check_branch
        %285 = sbr.rel (%p283) target = $region40
      $region39: #{tpu_custom_call.1} parent=5 // pred_region
        // Predicated region
        $region41: #{tpu_custom_call.1} parent=39 // pred_check
          %p286 = pneg %p39
        $region42: #{tpu_custom_call.1} parent=39 // pred_check_branch
          %288 = sbr.rel (%p286) target = $region44
        $region43: #{tpu_custom_call.1} parent=39 // pred_region
          %p289 = scmp.lt.s32.totalorder %s19, 7
          %s290 = scalar_select %p289, %s19, 7
          %s291 = smul.addr %s290, 2
          %s292 = smul.addr %s291, 8
          %s293 = scalar_lea.vmem %s0, %s292
        $region44: #{tpu_custom_call.1} parent=39 // pred_fallthru
          _
        // Predicated region
        $region45: #{tpu_custom_call.1} parent=39 // pred_check
          %p294 = pneg %p65
        $region46: #{tpu_custom_call.1} parent=39 // pred_check_branch
          %296 = sbr.rel (%p294) target = $region48
        $region47: #{tpu_custom_call.1} parent=39 // pred_region
          %p297 = scmp.lt.s32.totalorder %s19, 7
          %s298 = scalar_select %p297, %s19, 7
          %s299 = smul.addr %s298, 2
          %s300 = smul.addr %s299, 8
          %s301 = scalar_lea.vmem %s1, %s300
        $region48: #{tpu_custom_call.1} parent=39 // pred_fallthru
          _
        // Predicated region
        $region49: #{tpu_custom_call.1} parent=39 // pred_check
          %p302 = pneg %p91
        $region50: #{tpu_custom_call.1} parent=39 // pred_check_branch
          %304 = sbr.rel (%p302) target = $region52
        $region51: #{tpu_custom_call.1} parent=39 // pred_region
          %p305 = scmp.lt.s32.totalorder %s19, 7
          %s306 = scalar_select %p305, %s19, 7
          %s307 = smul.addr %s306, 2
          %s308 = smul.addr %s307, 8
          %s309 = scalar_lea.vmem %s2, %s308
        $region52: #{tpu_custom_call.1} parent=39 // pred_fallthru
          _
      $region40: #{tpu_custom_call.1} parent=5 // pred_fallthru
        _
      %p310 = scmp.le.s32.totalorder 1, %s19
      %p311 = scmp.lt.s32.totalorder %s19, 9
      %p312 = pnand %p310, %p311
      %p313 = pneg %p312
      // Predicated region
      $region53: #{tpu_custom_call.1} parent=5 // pred_check
        _
      $region54: #{tpu_custom_call.1} parent=5 // pred_check_branch
        %315 = sbr.rel (%p312) target = $region56
      $region55: #{tpu_custom_call.1} parent=5 // pred_region
        %s316 = ssub.s32 %s19, 1
        %p317 = scmp.lt.s32.totalorder %s24, 7
        %s318 = scalar_select %p317, %s24, 7
        %s319 = smul.addr %s318, 2
        %s320 = smul.addr %s319, 8
        %s321 = scalar_lea.vmem %s0, %s320
        %p322 = pneg %p45
        %p323 = pneg %p42
        %p324 = scmp.lt.s32.totalorder %s24, 7
        %s325 = scalar_select %p324, %s24, 7
        %s326 = smul.addr %s325, 2
        %s327 = smul.addr %s326, 8
        %s328 = scalar_lea.vmem %s1, %s327
        %p329 = pneg %p71
        %p330 = pneg %p68
        %p331 = scmp.lt.s32.totalorder %s24, 7
        %s332 = scalar_select %p331, %s24, 7
        %s333 = smul.addr %s332, 2
        %s334 = smul.addr %s333, 8
        %s335 = scalar_lea.vmem %s2, %s334
        %p336 = pneg %p97
        %p337 = pneg %p94
        %p338 = pneg %p118
        %p339 = pneg %p115
        %p340 = pneg %p139
        %p341 = pneg %p136
        %p342 = pneg %p160
        %p343 = pneg %p157
        %p344 = pneg %p181
        %p345 = pneg %p178
        %p346 = pneg %p202
        %p347 = pneg %p199
        %p348 = pneg %p223
        %p349 = pneg %p220
        %p350 = pneg %p249
        %p351 = pneg %p246
        %s352 = sand.u32 %s236, 1
        %s353 = scalar_lea.sflag [#allocation4], %s352
        %s354 = sand.u32 %s236, 1
        %s355 = scalar_lea.vmem [#allocation3], %s354
        %p356 = scmp.lt.s32.totalorder %s24, 7
        %s357 = scalar_select %p356, %s24, 7
        %s358 = smul.addr %s357, 2
        %s359 = smul.addr %s358, 8
        %s360 = scalar_lea.vmem %s0, %s359
        %p361 = scmp.lt.s32.totalorder %s24, 7
        %s362 = scalar_select %p361, %s24, 7
        %s363 = smul.addr %s362, 2
        %s364 = smul.addr %s363, 8
        %s365 = scalar_lea.vmem %s1, %s364
        %p366 = scmp.lt.s32.totalorder %s24, 7
        %s367 = scalar_select %p366, %s24, 7
        %s368 = smul.addr %s367, 2
        %s369 = smul.addr %s368, 8
        %s370 = scalar_lea.vmem %s2, %s369
        %v371 = vld [vmem:[%s360] sm:$0xff]
        %v372 = vld [vmem:[%s360 + $0x8] sm:$0xff]
        %v373 = vld [vmem:[%s365] sm:$0xff]
        %v374 = vld [vmem:[%s365 + $0x8] sm:$0xff]
        %v375 = vld [vmem:[%s370] sm:$0xff]
        %v376 = vld [vmem:[%s370 + $0x8] sm:$0xff]
        %v377 = vld [vmem:[%s3] sm:$0x1]
        %379 = vset.pattern.permute.xlu0 0
        %380 = vperm.xlu0 %379, %v373
        %v381 = vpop.permute.xlu0 %380
        %384 = vset.pattern.permute.xlu0 0
        %385 = vperm.xlu0 %384, %v374
        %v386 = vpop.permute.xlu0 %385
        %v389 = vperm.slane %v377, 0
        %v391 = vmul.f32 %v381, %v389
        %v392 = vmul.f32 %v386, %v389
        %394 = vset.pattern.permute.xlu0 0
        %395 = vperm.xlu0 %394, %v375
        %v396 = vpop.permute.xlu0 %395
        %399 = vset.pattern.permute.xlu0 0
        %400 = vperm.xlu0 %399, %v376
        %v401 = vpop.permute.xlu0 %400
        %v403 = vmul.f32 %v391, %v396
        %v404 = vmul.f32 %v392, %v401
        %vm405 = vcmask 130048
        %v407 = vsel %vm405, %v371, 0
        %v410 = vsel %vm405, %v372, 0
        %412 = vmatpush.msra.mxu0 0.0
        %413 = vmatpush.msra.mxu0 0.0
        %414 = vmatpush.msra.mxu0 0.0
        %415 = vmatpush.msra.mxu0 0.0
        %416 = vmatpush.msra.mxu0 0.0
        %417 = vmatpush.msra.mxu0 0.0
        %418 = vmatpush.msra.mxu0 0.0
        %419 = vmatpush.msra.mxu0 0.0
        %420 = vmatpush.msra.mxu0 0.0
        %421 = vmatpush.msra.mxu0 0.0
        %422 = vmatpush.msra.mxu0 0.0
        %423 = vmatpush.msra.mxu0 0.0
        %424 = vmatpush.msra.mxu0 0.0
        %425 = vmatpush.msra.mxu0 0.0
        %426 = vmatpush.msra.mxu0 %v404
        %427 = vmatpush.msra.mxu0 %v403
        %428 = vmatmul.f32.gmra.mxu0 %v407
        %v429 = vpop.f32.mrf.mxu0
        %v430 = vadd.f32 0.0, %v429
        %431 = vmatmul.f32.gmra.mxu0 %v410
        %v432 = vpop.f32.mrf.mxu0
        %v433 = vadd.f32 0.0, %v432
        %434 = vdwg.mxu0
        %v435 = vmul.f32 %v430, %v396
        %v436 = vmul.f32 %v433, %v401
        %v437 = vld [vmem:[%s4] sm:$0x1]
        %v439 = vperm.slane %v437, 0
        %v441 = vadd.f32 %v435, %v439
        %v442 = vadd.f32 %v436, %v439
        %v443 = vmax.f32 %v441, 0.0
        %v444 = vmax.f32 %v442, 0.0
        %v445 = vld [vmem:[%s5] sm:$0xff]
        %v446 = vld [vmem:[%s5 + $0x8] sm:$0xff]
        %v447 = vld [vmem:[%s5 + $0x10] sm:$0xff]
        %v448 = vld [vmem:[%s5 + $0x18] sm:$0xff]
        %v449 = vld [vmem:[%s5 + $0x20] sm:$0xff]
        %v450 = vld [vmem:[%s5 + $0x28] sm:$0xff]
        %v451 = vld [vmem:[%s5 + $0x30] sm:$0xff]
        %v452 = vld [vmem:[%s5 + $0x38] sm:$0xff]
        %v453 = vld [vmem:[%s5 + $0x40] sm:$0xff]
        %v454 = vld [vmem:[%s5 + $0x48] sm:$0xff]
        %v455 = vld [vmem:[%s5 + $0x50] sm:$0xff]
        %v456 = vld [vmem:[%s5 + $0x58] sm:$0xff]
        %v457 = vld [vmem:[%s5 + $0x60] sm:$0xff]
        %v458 = vld [vmem:[%s5 + $0x68] sm:$0xff]
        %v459 = vld [vmem:[%s5 + $0x70] sm:$0xff]
        %v460 = vld [vmem:[%s5 + $0x78] sm:$0xff]
        %461 = vmatpush.msra.mxu0 %v460
        %462 = vmatpush.msra.mxu0 %v459
        %463 = vmatpush.msra.mxu0 %v458
        %464 = vmatpush.msra.mxu0 %v457
        %465 = vmatpush.msra.mxu0 %v456
        %466 = vmatpush.msra.mxu0 %v455
        %467 = vmatpush.msra.mxu0 %v454
        %468 = vmatpush.msra.mxu0 %v453
        %469 = vmatpush.msra.mxu0 %v452
        %470 = vmatpush.msra.mxu0 %v451
        %471 = vmatpush.msra.mxu0 %v450
        %472 = vmatpush.msra.mxu0 %v449
        %473 = vmatpush.msra.mxu0 %v448
        %474 = vmatpush.msra.mxu0 %v447
        %475 = vmatpush.msra.mxu0 %v446
        %476 = vmatpush.msra.mxu0 %v445
        %477 = vmatmul.f32.gmra.mxu0 %v443
        %v478 = vpop.f32.mrf.mxu0
        %v479 = vadd.f32 0.0, %v478
        %480 = vmatmul.f32.gmra.mxu0 %v444
        %v481 = vpop.f32.mrf.mxu0
        %v482 = vadd.f32 0.0, %v481
        %483 = vdwg.mxu0
        %v484 = vmul.f32 %v479, %v396
        %v485 = vmul.f32 %v482, %v401
        %486 = vmatpush.msra.mxu0 0.0
        %487 = vmatpush.msra.mxu0 0.0
        %488 = vmatpush.msra.mxu0 0.0
        %489 = vmatpush.msra.mxu0 0.0
        %490 = vmatpush.msra.mxu0 0.0
        %491 = vmatpush.msra.mxu0 0.0
        %492 = vmatpush.msra.mxu0 0.0
        %493 = vmatpush.msra.mxu0 0.0
        %494 = vmatpush.msra.mxu0 0.0
        %495 = vmatpush.msra.mxu0 0.0
        %496 = vmatpush.msra.mxu0 0.0
        %497 = vmatpush.msra.mxu0 0.0
        %498 = vmatpush.msra.mxu0 0.0
        %499 = vmatpush.msra.mxu0 0.0
        %500 = vmatpush.msra.mxu0 %v485
        %501 = vmatpush.msra.mxu0 %v484
        %502 = vmatmul.f32.gmra.mxu0 %v407
        %v503 = vpop.f32.mrf.mxu0
        %v504 = vadd.f32 0.0, %v503
        %505 = vmatmul.f32.gmra.mxu0 %v410
        %v506 = vpop.f32.mrf.mxu0
        %v507 = vadd.f32 0.0, %v506
        %508 = vdwg.mxu0
        %v509 = vmul.f32 %v504, %v396
        %v510 = vmul.f32 %v507, %v401
        %v511 = vld [vmem:[%s6] sm:$0x1]
        %v513 = vperm.slane %v511, 0
        %v515 = vadd.f32 %v509, %v513
        %v516 = vadd.f32 %v510, %v513
        %v517 = vmax.f32 %v515, 0.0
        %v518 = vmax.f32 %v516, 0.0
        %v519 = vadd.f32 %v517, %v518
        %v520 = vrot.slane %v519, 4
        %v521 = vadd.f32 %v519, %v520
        %v522 = vrot.slane %v521, 2
        %v523 = vadd.f32 %v521, %v522
        %v524 = vrot.slane %v523, 1
        %v525 = vadd.f32 %v523, %v524
        %v526 = vmul.f32 %v525, 0.0625
        %v527 = vld [vmem:[%s7] sm:$0x1]
        %v528 = vmul.f32 %v526, %v527
        %vm529 = vcmask 1040384
        %v530 = vsel %vm529, %v528, 0.0
        %531 = vadd.xlane.f32.xlu0 %v530
        %v532 = vpop.xlane.xlu0 %531
        %s533 = sld [smem:[#allocation2]]
        %v534 = vstv %s533
        %v535 = vadd.f32 %v532, %v534
        %v536 = vxor.u32 %v535, 2147483648
        %v537 = vmul.f32 %v536, 1.442695
        %v538 = vpow.pop %v537
        %v539 = vadd.f32 %v538, 1.0
        %v540 = vrcp.pop %v539
        %v541 = vmul.f32 %v539, %v540
        %v542 = vsub.f32 1.0, %v541
        %v543 = vmul.f32 %v540, %v542
        %v544 = vadd.f32 %v540, %v543
        %vm545 = vweird.f32 %v539
        %vm546 = vweird.f32 %v540
        %vm547 = vmor %vm545, %vm546
        %v548 = vsel %vm547, %v540, %v544
        %v549 = vand.u32 2147483647, %v539
        %vm550 = vcmp.eq.f32.partialorder %v549, 8.507059e+37
        %v551 = vand.u32 %v539, 2147483648
        %v552 = vor.u32 1.1754944e-38, %v551
        %v553 = vsel %vm550, %v552, %v548
        %v554 = vmul.f32 1.0, %v553
        %555 = vst [vmem:[%s355] sm:$0x1] %v554
        %s556 = sand.u32 %s236, 1
        %s557 = scalar_lea.sflag [#allocation4], %s556
        %s558 = sand.u32 %s236, 1
        %s559 = scalar_lea.vmem [#allocation3], %s558
        // Predicated region
        $region57: #{tpu_custom_call.1} parent=55 // pred_check
          %p560 = pneg %p246
        $region58: #{tpu_custom_call.1} parent=55 // pred_check_branch
          %562 = sbr.rel (%p560) target = $region60
        $region59: #{tpu_custom_call.1} parent=55 // pred_region
          %564 = vsyncadd %s557, 0
          %s565 = scalar_lea.hbm %s9, %s24
          %s567 = sshll.u32 %s559, 4
          %s568 = int_to_ptr.vmem [resolvable:$true] %s567
          %s569 = sshll.u32 %s565, 4
          %s570 = int_to_ptr.hbm [resolvable:$true] %s569
          %572 = dma.vmem_to_hbm [thread:$0]  %s568, 16, %s570, %s557
        $region60: #{tpu_custom_call.1} parent=55 // pred_fallthru
          _
      $region56: #{tpu_custom_call.1} parent=5 // pred_fallthru
        _
      %p573 = scmp.le.s32.totalorder 2, %s19
      // Predicated region
      $region61: #{tpu_custom_call.1} parent=5 // pred_check
        %p574 = pneg %p573
      $region62: #{tpu_custom_call.1} parent=5 // pred_check_branch
        %576 = sbr.rel (%p574) target = $region64
      $region63: #{tpu_custom_call.1} parent=5 // pred_region
        %s577 = ssub.s32 %s19, 2
        // Predicated region
        $region65: #{tpu_custom_call.1} parent=63 // pred_check
          %p578 = pneg %p252
        $region66: #{tpu_custom_call.1} parent=63 // pred_check_branch
          %580 = sbr.rel (%p578) target = $region68
        $region67: #{tpu_custom_call.1} parent=63 // pred_region
          %s581 = sand.u32 %s237, 1
          %s582 = scalar_lea.sflag [#allocation4], %s581
          %s583 = sand.u32 %s237, 1
          %s584 = scalar_lea.vmem [#allocation3], %s583
          %586 = dma.done %s582, 16
        $region68: #{tpu_custom_call.1} parent=63 // pred_fallthru
          _
      $region64: #{tpu_custom_call.1} parent=5 // pred_fallthru
        _
    $region6: #{tpu_custom_call.1} parent=1 // loop_footer
      %s23 = sadd.s32 1, %s19
    $region7: #{tpu_custom_call.1} parent=1 // loop_footer_branch
      %18 = sbr.rel target = $region3
    $region8: #{tpu_custom_call.1} parent=1 // loop_exit
      _
    %587 = vsyncpa [#allocation4], 1
    %s588 = scalar_lea.sflag [#allocation4], 1
    %589 = vsyncpa %s588, 1

</llo_original>
